<compile_context>
chip_gen: v7x
topology: tpu7x:2x2x1
jax: 0.10.0
libtpu: 0.0.40
codegen_flags: <defaults>
</compile_context>

<pallas_src>
import functools
import math

import jax
import jax.numpy as jnp
from jax import lax
from jax.experimental import pallas as pl
from jax.experimental.pallas import tpu as pltpu


_IN_BYTES_BUDGET = 4 * 1024 * 1024   # per-step input block target (double-buffered)
_MIN_GRID_STEPS = 4                  # keep the pipeline fed / both v7x TCs busy


def _gaussian_taps_1d(kernel_size, sigma):
    """Normalized 1-D Gaussian taps; the module's 2-D kernel is their outer product."""
    mean = (kernel_size - 1) / 2.0
    var = float(sigma) ** 2
    g = [math.exp(-((i - mean) ** 2) / (2.0 * var)) for i in range(kernel_size)]
    total = sum(g)
    return tuple(v / total for v in g)


def _gaussian_taps_2d(kernel_size, sigma):
    """2-D normalized taps exactly as the PyTorch module builds them (reference)."""
    mean = (kernel_size - 1) / 2.0
    var = float(sigma) ** 2
    g = [[math.exp(-(((i - mean) ** 2) + ((j - mean) ** 2)) / (2.0 * var))
          for j in range(kernel_size)] for i in range(kernel_size)]
    total = sum(sum(row) for row in g)
    return [[v / total for v in row] for row in g]


# ---------------------------------------------------------------------------
# Kernel: separable Gaussian, wrap halo built on-chip, decimate-in-accumulation.
# ---------------------------------------------------------------------------
def _gauss_sep_kernel(x_ref, o_ref, *scratch, taps, K, stride, pad, H, W,
                      H_out, W_out, w_ext, use_scratch):
    s = stride
    BC = o_ref.shape[0]
    f32 = jnp.float32

    if use_scratch:
        # Build the (rows-then-columns) wrap-padded plane once in a VMEM scratch.
        # All halo traffic stays on-chip -- no extra HBM pass in the wrapper.
        scr = scratch[0]
        wcp = min(W, scr.shape[2])
        scr[:, :H, :wcp] = x_ref[:, :, :wcp]
        if pad:
            scr[:, H:H + K - 1, :wcp] = x_ref[:, :K - 1, :wcp]   # bottom row wrap
            ncol = min(K - 1, scr.shape[2] - W)
            if ncol > 0:
                # right column wrap of the *row-padded* plane (includes corner)
                scr[:, :, W:W + ncol] = scr[:, :, :ncol]
        src = scr
    else:
        src = x_ref

    # ---- Vertical (row-tap) pass: one sublane-strided ref load per tap. ----
    v = None
    for kh in range(K):
        if s > 1:
            slab = src[:, pl.ds(kh, H_out, stride=s), :]
        else:
            slab = src[:, pl.ds(kh, H_out), :]
        term = taps[kh] * slab.astype(f32)
        v = term if v is None else v + term

    # ---- Horizontal (column-tap) pass, decimating while accumulating. ------
    # Output column i reads v's (virtual) column kw + i*s.  Split the lane axis
    # into (wp, s) and extract the s column phases once, so every tap is a
    # plain unstrided lane slice and the accumulator is only W_out wide.
    if v.shape[2] > w_ext:
        v = lax.slice(v, (0, 0, 0), (BC, H_out, w_ext))
    wp = w_ext // s
    phases = v.reshape(BC, H_out, wp, s)
    phase = {}
    acc = jnp.zeros((BC, H_out, W_out), f32)
    for kw in range(K):
        q, r = divmod(kw, s)
        if r not in phase:
            phase[r] = phases[..., r]
        acc = acc + taps[kw] * lax.slice(phase[r], (0, 0, q), (BC, H_out, q + W_out))

    o_ref[...] = acc.astype(o_ref.dtype)


def _pick_block_channels(nc, plane_bytes):
    """Largest divisor of nc that fits the VMEM budget while keeping >= ~4
    (preferably even) grid steps so the pipeline double-buffers and both v7x
    TensorCores get work."""
    budget = max(1, _IN_BYTES_BUDGET // max(plane_bytes, 1))
    divisors = [d for d in range(1, nc + 1) if nc % d == 0]
    cands = [d for d in divisors
             if d <= budget and nc // d >= min(_MIN_GRID_STEPS, nc)]
    if not cands:
        cands = [d for d in divisors if d <= budget] or [1]
    even = [d for d in cands if (nc // d) % 2 == 0]
    return max(even or cands)


def gaussian_downsample(x, kernel_size, sigma, stride, pad=False):
    """Forward pass of the PyTorch `gaussian_downsample` module.  x: (N, 3, H, W)."""
    K, s = int(kernel_size), int(stride)
    taps = _gaussian_taps_1d(K, sigma)

    N, C, H, W = x.shape
    H_in = H + (K - 1 if pad else 0)
    W_in = W + (K - 1 if pad else 0)
    H_out = (H_in - K) // s + 1
    W_out = (W_in - K) // s + 1

    w_need = (W_out - 1) * s + K          # highest (virtual) column read + 1
    w_ext = -(-w_need // s) * s           # rounded up to a multiple of s
    use_scratch = pad or (w_ext > W)      # need an on-chip padded/extended plane

    NC = N * C
    xf = x.reshape(NC, H, W)              # merges leading dims only (free)

    plane_bytes = H * W * x.dtype.itemsize
    bc = _pick_block_channels(NC, plane_bytes)

    H_scr = H + (K - 1 if pad else 0)
    scratch_shapes = (
        [pltpu.VMEM((bc, H_scr, w_ext), x.dtype)] if use_scratch else []
    )

    kernel = functools.partial(
        _gauss_sep_kernel, taps=taps, K=K, stride=s, pad=pad, H=H, W=W,
        H_out=H_out, W_out=W_out, w_ext=w_ext, use_scratch=use_scratch)

    out = pl.pallas_call(
        kernel,
        out_shape=jax.ShapeDtypeStruct((NC, H_out, W_out), x.dtype),
        grid=(NC // bc,),
        in_specs=[pl.BlockSpec((bc, H, W), lambda i: (i, 0, 0))],
        out_specs=pl.BlockSpec((bc, H_out, W_out), lambda i: (i, 0, 0)),
        scratch_shapes=scratch_shapes,
        compiler_params=pltpu.CompilerParams(
            dimension_semantics=("parallel",),
            vmem_limit_bytes=48 * 1024 * 1024,
        ),
    )(xf)
    return out.reshape(N, C, H_out, W_out)


# ---------------------------------------------------------------------------
# Pure-JAX reference (grouped conv), mirrors the PyTorch forward exactly.
# ---------------------------------------------------------------------------
def _reference(x, kernel_size, sigma, stride, pad=False):
    x = x.astype(jnp.float32)
    taps = jnp.asarray(_gaussian_taps_2d(kernel_size, sigma), dtype=jnp.float32)
    if pad:
        p = kernel_size - 1
        x = jnp.concatenate([x, x[:, :, :p, :]], axis=2)
        x = jnp.concatenate([x, x[:, :, :, :p]], axis=3)
    C = x.shape[1]
    w_full = jnp.broadcast_to(taps[None, None], (C, 1, kernel_size, kernel_size))
    return lax.conv_general_dilated(
        x, w_full,
        window_strides=(stride, stride),
        padding="VALID",
        feature_group_count=C,
        dimension_numbers=("NCHW", "OIHW", "NCHW"),
    )


if __name__ == "__main__":
    key = jax.random.PRNGKey(0)
    # The module is hard-wired to 3 channels (Conv2d(3, 3, K, groups=3, bias=False)).
    x = jax.random.normal(key, (2, 3, 16, 16), dtype=jnp.float32)

    kernel_size, sigma, stride = 3, 1.0, 2

    for pad in (True, False):   # exercises both the wrap-halo and direct paths
        out = gaussian_downsample(x, kernel_size, sigma, stride, pad=pad)
        out = jax.block_until_ready(out)

        ref = _reference(x, kernel_size, sigma, stride, pad=pad)
        assert out.shape == ref.shape, (pad, out.shape, ref.shape)
        assert out.dtype == x.dtype, (pad, out.dtype, x.dtype)
        assert jnp.allclose(out, ref.astype(out.dtype), atol=1e-5, rtol=1e-5), \
            f"mismatch vs reference conv (pad={pad})"

    print("KERNEL_OK")
</pallas_src>

<mosaic_0001>
module attributes {stable_mosaic.version = 11 : i64} {
  func.func @_gauss_sep_kernel(%arg0: i32, %arg1: memref<1x16x16xf32, #tpu.memory_space<vmem>>, %arg2: memref<1x8x8xf32, #tpu.memory_space<vmem>>, %arg3: memref<1x18x18xf32, #tpu.memory_space<vmem>>) attributes {dimension_semantics = [#tpu.dimension_semantics<parallel>], iteration_bounds = array<i64: 6>, scalar_prefetch = 0 : i64, scratch_operands = 1 : i64, tpu.core_type = #tpu.core_type<tc>, window_params = [{transform_indices = @transform_0, window_bounds = array<i64: 1, 16, 16>}, {transform_indices = @transform_1, window_bounds = array<i64: 1, 8, 8>}]} {
    %c0 = arith.constant 0 : index
    %c0_0 = arith.constant 0 : index
    %c0_1 = arith.constant 0 : index
    %0 = vector.load %arg1[%c0, %c0_0, %c0_1] : memref<1x16x16xf32, #tpu.memory_space<vmem>>, vector<1x16x16xf32>
    %c0_2 = arith.constant 0 : index
    %c0_3 = arith.constant 0 : index
    %c0_4 = arith.constant 0 : index
    %1 = vector.load %arg3[%c0_2, %c0_3, %c0_4] : memref<1x18x18xf32, #tpu.memory_space<vmem>>, vector<1x16x16xf32>
    tpu.vector_store %arg3[%c0_2, %c0_3, %c0_4], %0 {strides = array<i32>} : memref<1x18x18xf32, #tpu.memory_space<vmem>>, vector<1x16x16xf32>,
    %c0_5 = arith.constant 0 : index
    %c0_6 = arith.constant 0 : index
    %c0_7 = arith.constant 0 : index
    %2 = vector.load %arg1[%c0_5, %c0_6, %c0_7] : memref<1x16x16xf32, #tpu.memory_space<vmem>>, vector<1x2x16xf32>
    %c0_8 = arith.constant 0 : index
    %c16 = arith.constant 16 : index
    %c0_9 = arith.constant 0 : index
    %3 = vector.load %arg3[%c0_8, %c16, %c0_9] : memref<1x18x18xf32, #tpu.memory_space<vmem>>, vector<1x2x16xf32>
    tpu.vector_store %arg3[%c0_8, %c16, %c0_9], %2 {strides = array<i32>} : memref<1x18x18xf32, #tpu.memory_space<vmem>>, vector<1x2x16xf32>,
    %c0_10 = arith.constant 0 : index
    %c0_11 = arith.constant 0 : index
    %c0_12 = arith.constant 0 : index
    %4 = vector.load %arg3[%c0_10, %c0_11, %c0_12] : memref<1x18x18xf32, #tpu.memory_space<vmem>>, vector<1x18x2xf32>
    %c0_13 = arith.constant 0 : index
    %c0_14 = arith.constant 0 : index
    %c16_15 = arith.constant 16 : index
    %5 = vector.load %arg3[%c0_13, %c0_14, %c16_15] : memref<1x18x18xf32, #tpu.memory_space<vmem>>, vector<1x18x2xf32>
    tpu.vector_store %arg3[%c0_13, %c0_14, %c16_15], %4 {strides = array<i32>} : memref<1x18x18xf32, #tpu.memory_space<vmem>>, vector<1x18x2xf32>,
    %c0_16 = arith.constant 0 : index
    %c0_17 = arith.constant 0 : index
    %c0_18 = arith.constant 0 : index
    %6 = tpu.strided_load %arg3[%c0_16, %c0_17, %c0_18] {strides = array<i32: 1, 2, 1>} : memref<1x18x18xf32, #tpu.memory_space<vmem>>, vector<1x8x18xf32>
    %cst = arith.constant 0.274068624 : f32
    %7 = vector.broadcast %cst : f32 to vector<1x8x18xf32>
    %8 = arith.mulf %7, %6 : vector<1x8x18xf32>
    %c0_19 = arith.constant 0 : index
    %c1 = arith.constant 1 : index
    %c0_20 = arith.constant 0 : index
    %9 = tpu.strided_load %arg3[%c0_19, %c1, %c0_20] {strides = array<i32: 1, 2, 1>} : memref<1x18x18xf32, #tpu.memory_space<vmem>>, vector<1x8x18xf32>
    %cst_21 = arith.constant 0.451862752 : f32
    %10 = vector.broadcast %cst_21 : f32 to vector<1x8x18xf32>
    %11 = arith.mulf %10, %9 : vector<1x8x18xf32>
    %12 = arith.addf %8, %11 : vector<1x8x18xf32>
    %c0_22 = arith.constant 0 : index
    %c2 = arith.constant 2 : index
    %c0_23 = arith.constant 0 : index
    %13 = tpu.strided_load %arg3[%c0_22, %c2, %c0_23] {strides = array<i32: 1, 2, 1>} : memref<1x18x18xf32, #tpu.memory_space<vmem>>, vector<1x8x18xf32>
    %cst_24 = arith.constant 0.274068624 : f32
    %14 = vector.broadcast %cst_24 : f32 to vector<1x8x18xf32>
    %15 = arith.mulf %14, %13 : vector<1x8x18xf32>
    %16 = arith.addf %12, %15 : vector<1x8x18xf32>
    %17 = vector.shape_cast %16 : vector<1x8x18xf32> to vector<1x8x9x2xf32>
    %cst_25 = arith.constant 0.000000e+00 : f32
    %18 = vector.broadcast %cst_25 : f32 to vector<1x8x8xf32>
    %19 = vector.extract_strided_slice %17 {offsets = [0, 0, 0, 0], sizes = [1, 8, 9, 1], strides = [1, 1, 1, 1]} : vector<1x8x9x2xf32> to vector<1x8x9x1xf32>
    %20 = vector.shape_cast %19 : vector<1x8x9x1xf32> to vector<1x8x9xf32>
    %21 = vector.extract_strided_slice %20 {offsets = [0, 0, 0], sizes = [1, 8, 8], strides = [1, 1, 1]} : vector<1x8x9xf32> to vector<1x8x8xf32>
    %cst_26 = arith.constant 0.274068624 : f32
    %22 = vector.broadcast %cst_26 : f32 to vector<1x8x8xf32>
    %23 = arith.mulf %22, %21 : vector<1x8x8xf32>
    %24 = arith.addf %18, %23 : vector<1x8x8xf32>
    %25 = vector.extract_strided_slice %17 {offsets = [0, 0, 0, 1], sizes = [1, 8, 9, 1], strides = [1, 1, 1, 1]} : vector<1x8x9x2xf32> to vector<1x8x9x1xf32>
    %26 = vector.shape_cast %25 : vector<1x8x9x1xf32> to vector<1x8x9xf32>
    %27 = vector.extract_strided_slice %26 {offsets = [0, 0, 0], sizes = [1, 8, 8], strides = [1, 1, 1]} : vector<1x8x9xf32> to vector<1x8x8xf32>
    %cst_27 = arith.constant 0.451862752 : f32
    %28 = vector.broadcast %cst_27 : f32 to vector<1x8x8xf32>
    %29 = arith.mulf %28, %27 : vector<1x8x8xf32>
    %30 = arith.addf %24, %29 : vector<1x8x8xf32>
    %31 = vector.extract_strided_slice %20 {offsets = [0, 0, 1], sizes = [1, 8, 8], strides = [1, 1, 1]} : vector<1x8x9xf32> to vector<1x8x8xf32>
    %cst_28 = arith.constant 0.274068624 : f32
    %32 = vector.broadcast %cst_28 : f32 to vector<1x8x8xf32>
    %33 = arith.mulf %32, %31 : vector<1x8x8xf32>
    %34 = arith.addf %30, %33 : vector<1x8x8xf32>
    %c0_29 = arith.constant 0 : index
    %c0_30 = arith.constant 0 : index
    %c0_31 = arith.constant 0 : index
    %35 = vector.load %arg2[%c0_29, %c0_30, %c0_31] : memref<1x8x8xf32, #tpu.memory_space<vmem>>, vector<1x8x8xf32>
    tpu.vector_store %arg2[%c0_29, %c0_30, %c0_31], %34 {strides = array<i32>} : memref<1x8x8xf32, #tpu.memory_space<vmem>>, vector<1x8x8xf32>,
    return
  }
  func.func @transform_0(%arg0: i32) -> (i32, i32, i32) {
    %c0_i32 = arith.constant 0 : i32
    %c0_i32_0 = arith.constant 0 : i32
    %c0_i32_1 = arith.constant 0 : i32
    return %arg0, %c0_i32, %c0_i32_0 : i32, i32, i32
  }
  func.func @transform_1(%arg0: i32) -> (i32, i32, i32) {
    %c0_i32 = arith.constant 0 : i32
    %c0_i32_0 = arith.constant 0 : i32
    %c0_i32_1 = arith.constant 0 : i32
    return %arg0, %c0_i32, %c0_i32_0 : i32, i32, i32
  }
}

</mosaic_0001>

<llo_original>
// kernel: tpu_custom_call.1
$region0: #{tpu_custom_call.1}
  #allocation0 [shape = 'u32[]', space=smem, size = 0x4, offset = 0x4, fixed_abs, tag = 'smem constant byte address 0x4 - core index']
  #allocation1 [shape = 'u32[144,128]{1,0:T(1,128)}', space=vmem, size = 0x12000, scoped, tag = 'internal scratch']
  #allocation2 [shape = 'f32[1,18,18]{2,1,0:T(8,128)}', space=vmem, size = 0x3000, scoped, tag = 'scratch operand']
  %s0 = inlined_call_operand.hbm [shape: f32[6,16,16], index: 0, kind: input, shape index: {}]
  %s1 = inlined_call_operand.hbm [shape: f32[6,8,8], index: 1, kind: output, shape index: {}]
  %s2 = sld [smem:[#allocation0]]
  $region41: #{tpu_custom_call.1} parent=0
    _
  %s4 = ssub.s32 1, %s2
  %s5 = scalar_select 0, %s4, %s2
  $region1: #{tpu_custom_call.1} parent=0
    #allocation3 [shape = 'u8[16384]{0}', space=vmem, size = 0x4000, scoped, tag = 'input window, operand 0']
    #allocation4 [shape = 's32[2]{0}', space=sflag, size = 0x8, scoped, tag = 'scoped memory for tpu_custom_call.1']
    #allocation5 [shape = 's32[2]{0}', space=sflag, size = 0x8, scoped, tag = 'scoped memory for tpu_custom_call.1']
    #allocation6 [shape = 'u8[8192]{0}', space=vmem, size = 0x2000, scoped, tag = 'output window, operand 0']
    %6 = vsyncpa [#allocation4], 0
    %s7 = scalar_lea.sflag [#allocation4], 1
    %8 = vsyncpa %s7, 0
    %9 = vsyncpa [#allocation5], 0
    %s10 = scalar_lea.sflag [#allocation5], 1
    %11 = vsyncpa %s10, 0
    loop: start=0, step=1, limit=8
    $region2: #{tpu_custom_call.1} parent=1 // loop_pre_header
      _
    $region3: #{tpu_custom_call.1} parent=1 // loop_header
      %s13 = sphi 0, %s17
      %p14 = scmp.ge.s32.totalorder %s13, 8
      %s23 = sphi 0, %s25
      %s26 = sphi 0, %s23
      %s27 = sphi 0, %s26
      %s43 = sphi 0, %s27
      %s49 = sphi 0, %s51
      %s52 = sphi 0, %s49
      %s53 = sphi 0, %s52
      %s69 = sphi 0, %s53
    $region4: #{tpu_custom_call.1} parent=1 // loop_header_branch
      %16 = sbr.rel (%p14) target = $region8
    $region5: #{tpu_custom_call.1} parent=1 // loop_body
      %s18 = ssub.s32 %s13, 1
      %s19 = ssub.s32 %s13, 2
      %s20 = sadd.s32 %s13, 1
      %s21 = ssub.s32 %s13, %s20
      %p22 = scmp.eq.s32.totalorder %s21, 0
      %s24 = sadd.s32 %s23, 1
      %s25 = scalar_select %p22, %s23, %s24
      %p28 = pneg %p22
      %p29 = scmp.eq.s32.totalorder %s13, 5
      %p30 = por %p28, %p29
      %p31 = scmp.ne.s32.totalorder %s23, %s26
      %p32 = scmp.eq.s32.totalorder %s13, 0
      %p33 = por %p31, %p32
      %p34 = scmp.ne.s32.totalorder %s23, %s26
      %p35 = scmp.eq.s32.totalorder %s18, 5
      %p36 = por %p34, %p35
      %p37 = scmp.ne.s32.totalorder %s26, %s27
      %p38 = scmp.eq.s32.totalorder %s18, 0
      %p39 = por %p37, %p38
      %p40 = scmp.ne.s32.totalorder %s26, %s27
      %p41 = scmp.eq.s32.totalorder %s19, 5
      %p42 = por %p40, %p41
      %p44 = scmp.ne.s32.totalorder %s27, %s43
      %p45 = scmp.eq.s32.totalorder %s19, 0
      %p46 = por %p44, %p45
      %s47 = ssub.s32 %s13, %s20
      %p48 = scmp.eq.s32.totalorder %s47, 0
      %s50 = sadd.s32 %s49, 1
      %s51 = scalar_select %p48, %s49, %s50
      %p54 = pneg %p48
      %p55 = scmp.eq.s32.totalorder %s13, 5
      %p56 = por %p54, %p55
      %p57 = scmp.ne.s32.totalorder %s49, %s52
      %p58 = scmp.eq.s32.totalorder %s13, 0
      %p59 = por %p57, %p58
      %p60 = scmp.ne.s32.totalorder %s49, %s52
      %p61 = scmp.eq.s32.totalorder %s18, 5
      %p62 = por %p60, %p61
      %p63 = scmp.ne.s32.totalorder %s52, %s53
      %p64 = scmp.eq.s32.totalorder %s18, 0
      %p65 = por %p63, %p64
      %p66 = scmp.ne.s32.totalorder %s52, %s53
      %p67 = scmp.eq.s32.totalorder %s19, 5
      %p68 = por %p66, %p67
      %p70 = scmp.ne.s32.totalorder %s53, %s69
      %p71 = scmp.eq.s32.totalorder %s19, 0
      %p72 = por %p70, %p71
      %p73 = scmp.le.s32.totalorder 1, %s13
      %p74 = scmp.lt.s32.totalorder %s13, 7
      %p75 = pnand %p73, %p74
      %p76 = pneg %p75
      // Predicated region
      $region9: #{tpu_custom_call.1} parent=5 // pred_check
        _
      $region10: #{tpu_custom_call.1} parent=5 // pred_check_branch
        %78 = sbr.rel (%p75) target = $region12
      $region11: #{tpu_custom_call.1} parent=5 // pred_region
        %s79 = ssub.s32 %s13, 1
      $region12: #{tpu_custom_call.1} parent=5 // pred_fallthru
        _
      %p80 = scmp.lt.s32.totalorder %s13, 6
      // Predicated region
      $region13: #{tpu_custom_call.1} parent=5 // pred_check
        %p81 = pneg %p80
      $region14: #{tpu_custom_call.1} parent=5 // pred_check_branch
        %83 = sbr.rel (%p81) target = $region16
      $region15: #{tpu_custom_call.1} parent=5 // pred_region
        // Predicated region
        $region17: #{tpu_custom_call.1} parent=15 // pred_check
          %p84 = pneg %p33
        $region18: #{tpu_custom_call.1} parent=15 // pred_check_branch
          %86 = sbr.rel (%p84) target = $region20
        $region19: #{tpu_custom_call.1} parent=15 // pred_region
          %s87 = sand.u32 %s23, 1
          %s88 = scalar_lea.sflag [#allocation4], %s87
          %s89 = sand.u32 %s23, 1
          %s90 = smul.addr %s89, 16
          %s91 = scalar_lea.vmem [#allocation3], %s90
          %s93 = ssub.s32 256, 256
          %94 = vsyncadd %s88, %s93
          %s95 = smul.addr %s13, 2
          %s96 = smul.addr %s95, 128
          %s97 = scalar_lea.hbm %s0, %s96
          %s98 = sshll.u32 %s91, 4
          %s99 = int_to_ptr.vmem [resolvable:$true] %s98
          %104 = dma.hbm_to_vmem [thread:$0]  %s97, 256, %s99, %s88, 128, 128, 8
        $region20: #{tpu_custom_call.1} parent=15 // pred_fallthru
          _
      $region16: #{tpu_custom_call.1} parent=5 // pred_fallthru
        _
      %p105 = scmp.le.s32.totalorder 1, %s13
      %p106 = scmp.lt.s32.totalorder %s13, 7
      %p107 = pnand %p105, %p106
      %p108 = pneg %p107
      // Predicated region
      $region21: #{tpu_custom_call.1} parent=5 // pred_check
        _
      $region22: #{tpu_custom_call.1} parent=5 // pred_check_branch
        %110 = sbr.rel (%p107) target = $region24
      $region23: #{tpu_custom_call.1} parent=5 // pred_region
        %s111 = ssub.s32 %s13, 1
        %s112 = sand.u32 %s26, 1
        %s113 = scalar_lea.sflag [#allocation4], %s112
        %s114 = sand.u32 %s26, 1
        %s115 = smul.addr %s114, 16
        %s116 = scalar_lea.vmem [#allocation3], %s115
        // Predicated region
        $region25: #{tpu_custom_call.1} parent=23 // pred_check
          %p117 = pneg %p39
        $region26: #{tpu_custom_call.1} parent=23 // pred_check_branch
          %119 = sbr.rel (%p117) target = $region28
        $region27: #{tpu_custom_call.1} parent=23 // pred_region
          %120 = dma.done %s113, 256
        $region28: #{tpu_custom_call.1} parent=23 // pred_fallthru
          _
        %s121 = sand.u32 %s26, 1
        %s122 = scalar_lea.sflag [#allocation4], %s121
        %s123 = sand.u32 %s26, 1
        %s124 = smul.addr %s123, 16
        %s125 = scalar_lea.vmem [#allocation3], %s124
        %p126 = pneg %p39
        %p127 = pneg %p36
        %p128 = pneg %p65
        %p129 = pneg %p62
        %s130 = sand.u32 %s52, 1
        %s131 = scalar_lea.sflag [#allocation5], %s130
        %s132 = sand.u32 %s52, 1
        %s133 = smul.addr %s132, 8
        %s134 = scalar_lea.vmem [#allocation6], %s133
        %v135 = vld [vmem:[%s116] sm:$0xff]
        %v136 = vld [vmem:[%s116 + $0x8] sm:$0xff]
        %vm137 = vcmask 130048
        %138 = vst.msk [vmem:[#allocation2] sm:$0xff] %vm137, %v135
        %139 = vst.msk [vmem:[#allocation2 + $0x8] sm:$0xff] %vm137, %v136
        %v140 = vld [vmem:[%s116] sm:$0x3]
        %vm141 = vcmask 123904
        %142 = vst.msk [vmem:[#allocation2 + $0x10] sm:$0x3] %vm141, %v140
        %v143 = vld [vmem:[#allocation2] sm:$0xff]
        %v144 = vld [vmem:[#allocation2 + $0x8] sm:$0xff]
        %v145 = vld [vmem:[#allocation2 + $0x10] sm:$0x3]
        %149 = vrot.lane.b32.xlu0 %v143, 16
        %v150 = vpop.permute.xlu0 %149
        %151 = vrot.lane.b32.xlu0 %v144, 16
        %v152 = vpop.permute.xlu0 %151
        %153 = vrot.lane.b32.xlu0 %v145, 16
        %v154 = vpop.permute.xlu0 %153
        %vm158 = vcmask 146560
        %159 = vst.msk [vmem:[#allocation2] sm:$0xff] %vm158, %v150
        %160 = vst.msk [vmem:[#allocation2 + $0x8] sm:$0xff] %vm158, %v152
        %vm161 = vcmask 140416
        %162 = vst.msk [vmem:[#allocation2 + $0x10] sm:$0x3] %vm161, %v154
        %v163 = vld [vmem:[#allocation2] ss:$2 sm:$0xff]
        %v164 = vmul.f32 %v163, 0.27406862
        %s165 = scalar_lea.vmem [#allocation2], 1
        %v166 = vld [vmem:[%s165] ss:$2 sm:$0xff]
        %v167 = vmul.f32 %v166, 0.45186275
        %v168 = vadd.f32 %v164, %v167
        %s169 = scalar_lea.vmem [#allocation2], 2
        %v170 = vld [vmem:[%s169] ss:$2 sm:$0xff]
        %v171 = vmul.f32 %v170, 0.27406862
        %v172 = vadd.f32 %v168, %v171
        %174 = vrot.lane.b32.xlu0 %v172, 126
        %v175 = vpop.permute.xlu0 %174
        %177 = vrot.lane.b32.xlu0 %v172, 124
        %v178 = vpop.permute.xlu0 %177
        %180 = vrot.lane.b32.xlu0 %v172, 122
        %v181 = vpop.permute.xlu0 %180
        %183 = vrot.lane.b32.xlu0 %v172, 120
        %v184 = vpop.permute.xlu0 %183
        %186 = vrot.lane.b32.xlu0 %v172, 118
        %v187 = vpop.permute.xlu0 %186
        %189 = vrot.lane.b32.xlu0 %v172, 116
        %v190 = vpop.permute.xlu0 %189
        %192 = vrot.lane.b32.xlu0 %v172, 114
        %v193 = vpop.permute.xlu0 %192
        %195 = vrot.lane.b32.xlu0 %v172, 112
        %v196 = vpop.permute.xlu0 %195
        %v198 = vcombine.low %v172, %v178
        %v199 = vcombine.high %v172, %v178
        %v201 = vunpack.c.l.s4 1983009808
        %v202 = vunpack.c.0.s8 %v201
        %v203 = vlaneseq
        %v204 = vshrl.u32 %v203, 7
        %v205 = vsub.s32 %v202, %v204
        %v206 = vrot.slane %v198, %v205
        %v208 = vunpack.c.l.s4 1983009808
        %v209 = vunpack.c.0.s8 %v208
        %v210 = vlaneseq
        %v211 = vshrl.u32 %v210, 7
        %v212 = vsub.s32 %v209, %v211
        %v213 = vrot.slane %v199, %v212
        %v214 = vcombine.low %v175, %v181
        %v215 = vcombine.high %v175, %v181
        %v217 = vunpack.c.l.s4 1983009808
        %v218 = vunpack.c.0.s8 %v217
        %v219 = vlaneseq
        %v220 = vshrl.u32 %v219, 7
        %v221 = vsub.s32 %v218, %v220
        %v222 = vrot.slane %v214, %v221
        %v224 = vunpack.c.l.s4 1983009808
        %v225 = vunpack.c.0.s8 %v224
        %v226 = vlaneseq
        %v227 = vshrl.u32 %v226, 7
        %v228 = vsub.s32 %v225, %v227
        %v229 = vrot.slane %v215, %v228
        %v230 = vcombine.low %v184, %v190
        %v231 = vcombine.high %v184, %v190
        %v233 = vunpack.c.l.s4 1983009808
        %v234 = vunpack.c.0.s8 %v233
        %v235 = vlaneseq
        %v236 = vshrl.u32 %v235, 7
        %v237 = vsub.s32 %v234, %v236
        %v238 = vrot.slane %v230, %v237
        %v240 = vunpack.c.l.s4 1983009808
        %v241 = vunpack.c.0.s8 %v240
        %v242 = vlaneseq
        %v243 = vshrl.u32 %v242, 7
        %v244 = vsub.s32 %v241, %v243
        %v245 = vrot.slane %v231, %v244
        %v246 = vcombine.low %v187, %v193
        %v247 = vcombine.high %v187, %v193
        %v249 = vunpack.c.l.s4 1983009808
        %v250 = vunpack.c.0.s8 %v249
        %v251 = vlaneseq
        %v252 = vshrl.u32 %v251, 7
        %v253 = vsub.s32 %v250, %v252
        %v254 = vrot.slane %v246, %v253
        %v256 = vunpack.c.l.s4 1983009808
        %v257 = vunpack.c.0.s8 %v256
        %v258 = vlaneseq
        %v259 = vshrl.u32 %v258, 7
        %v260 = vsub.s32 %v257, %v259
        %v261 = vrot.slane %v247, %v260
        %v262 = vcombine.low %v206, %v222
        %v263 = vcombine.high %v206, %v222
        %v265 = vunpack.c.l.s4 1934713408
        %v266 = vunpack.c.0.s8 %v265
        %v267 = vlaneseq
        %v268 = vshrl.u32 %v267, 7
        %v269 = vsub.s32 %v266, %v268
        %v270 = vrot.slane %v262, %v269
        %v272 = vunpack.c.l.s4 1934713408
        %v273 = vunpack.c.0.s8 %v272
        %v274 = vlaneseq
        %v275 = vshrl.u32 %v274, 7
        %v276 = vsub.s32 %v273, %v275
        %v277 = vrot.slane %v263, %v276
        %v278 = vcombine.low %v213, %v229
        %v279 = vcombine.high %v213, %v229
        %v281 = vunpack.c.l.s4 1934713408
        %v282 = vunpack.c.0.s8 %v281
        %v283 = vlaneseq
        %v284 = vshrl.u32 %v283, 7
        %v285 = vsub.s32 %v282, %v284
        %v286 = vrot.slane %v278, %v285
        %v288 = vunpack.c.l.s4 1934713408
        %v289 = vunpack.c.0.s8 %v288
        %v290 = vlaneseq
        %v291 = vshrl.u32 %v290, 7
        %v292 = vsub.s32 %v289, %v291
        %v293 = vrot.slane %v279, %v292
        %v294 = vcombine.low %v238, %v254
        %v295 = vcombine.high %v238, %v254
        %v297 = vunpack.c.l.s4 1934713408
        %v298 = vunpack.c.0.s8 %v297
        %v299 = vlaneseq
        %v300 = vshrl.u32 %v299, 7
        %v301 = vsub.s32 %v298, %v300
        %v302 = vrot.slane %v294, %v301
        %v304 = vunpack.c.l.s4 1934713408
        %v305 = vunpack.c.0.s8 %v304
        %v306 = vlaneseq
        %v307 = vshrl.u32 %v306, 7
        %v308 = vsub.s32 %v305, %v307
        %v309 = vrot.slane %v295, %v308
        %v310 = vcombine.low %v245, %v261
        %v311 = vcombine.high %v245, %v261
        %v313 = vunpack.c.l.s4 1934713408
        %v314 = vunpack.c.0.s8 %v313
        %v315 = vlaneseq
        %v316 = vshrl.u32 %v315, 7
        %v317 = vsub.s32 %v314, %v316
        %v318 = vrot.slane %v310, %v317
        %v320 = vunpack.c.l.s4 1934713408
        %v321 = vunpack.c.0.s8 %v320
        %v322 = vlaneseq
        %v323 = vshrl.u32 %v322, 7
        %v324 = vsub.s32 %v321, %v323
        %v325 = vrot.slane %v311, %v324
        %v326 = vcombine.low %v270, %v302
        %v327 = vcombine.high %v270, %v302
        %v328 = vcombine.low %v277, %v309
        %v329 = vcombine.high %v277, %v309
        %v330 = vcombine.low %v286, %v318
        %v331 = vcombine.high %v286, %v318
        %v332 = vcombine.low %v293, %v325
        %v333 = vcombine.high %v293, %v325
        %v334 = vcombine.high %v196, 0.0
        %v336 = vunpack.c.l.s4 1983009808
        %v337 = vunpack.c.0.s8 %v336
        %v338 = vlaneseq
        %v339 = vshrl.u32 %v338, 7
        %v340 = vsub.s32 %v337, %v339
        %v341 = vrot.slane %v196, %v340
        %v343 = vunpack.c.l.s4 1983009808
        %v344 = vunpack.c.0.s8 %v343
        %v345 = vlaneseq
        %v346 = vshrl.u32 %v345, 7
        %v347 = vsub.s32 %v344, %v346
        %v348 = vrot.slane %v334, %v347
        %v349 = vcombine.high %v341, 0.0
        %v351 = vunpack.c.l.s4 1934713408
        %v352 = vunpack.c.0.s8 %v351
        %v353 = vlaneseq
        %v354 = vshrl.u32 %v353, 7
        %v355 = vsub.s32 %v352, %v354
        %v356 = vrot.slane %v341, %v355
        %v358 = vunpack.c.l.s4 1934713408
        %v359 = vunpack.c.0.s8 %v358
        %v360 = vlaneseq
        %v361 = vshrl.u32 %v360, 7
        %v362 = vsub.s32 %v359, %v361
        %v363 = vrot.slane %v349, %v362
        %v364 = vcombine.high %v348, 0.0
        %v366 = vunpack.c.l.s4 1934713408
        %v367 = vunpack.c.0.s8 %v366
        %v368 = vlaneseq
        %v369 = vshrl.u32 %v368, 7
        %v370 = vsub.s32 %v367, %v369
        %v371 = vrot.slane %v348, %v370
        %v373 = vunpack.c.l.s4 1934713408
        %v374 = vunpack.c.0.s8 %v373
        %v375 = vlaneseq
        %v376 = vshrl.u32 %v375, 7
        %v377 = vsub.s32 %v374, %v376
        %v378 = vrot.slane %v364, %v377
        %v379 = vcombine.high %v356, 0.0
        %v380 = vcombine.high %v363, 0.0
        %v381 = vcombine.high %v371, 0.0
        %v382 = vcombine.high %v378, 0.0
        %v383 = vmul.f32 %v326, 0.27406862
        %v384 = vmul.f32 %v327, 0.27406862
        %v385 = vmul.f32 %v328, 0.27406862
        %v386 = vmul.f32 %v329, 0.27406862
        %v387 = vmul.f32 %v330, 0.27406862
        %v388 = vmul.f32 %v331, 0.27406862
        %v389 = vmul.f32 %v332, 0.27406862
        %v390 = vmul.f32 %v333, 0.27406862
        %v391 = vadd.f32 %v383, 0.0
        %v392 = vadd.f32 %v384, 0.0
        %v393 = vadd.f32 %v385, 0.0
        %v394 = vadd.f32 %v386, 0.0
        %v395 = vadd.f32 %v387, 0.0
        %v396 = vadd.f32 %v388, 0.0
        %v397 = vadd.f32 %v389, 0.0
        %v398 = vadd.f32 %v390, 0.0
        %v399 = vmul.f32 %v326, 0.45186275
        %v400 = vmul.f32 %v327, 0.45186275
        %v401 = vmul.f32 %v328, 0.45186275
        %v402 = vmul.f32 %v329, 0.45186275
        %v403 = vmul.f32 %v330, 0.45186275
        %v404 = vmul.f32 %v331, 0.45186275
        %v405 = vmul.f32 %v332, 0.45186275
        %v406 = vmul.f32 %v333, 0.45186275
        %415 = vrot.lane.b32.xlu0 %v399, 127
        %v416 = vpop.permute.xlu0 %415
        %417 = vrot.lane.b32.xlu0 %v400, 127
        %v418 = vpop.permute.xlu0 %417
        %419 = vrot.lane.b32.xlu0 %v401, 127
        %v420 = vpop.permute.xlu0 %419
        %421 = vrot.lane.b32.xlu0 %v402, 127
        %v422 = vpop.permute.xlu0 %421
        %423 = vrot.lane.b32.xlu0 %v403, 127
        %v424 = vpop.permute.xlu0 %423
        %425 = vrot.lane.b32.xlu0 %v404, 127
        %v426 = vpop.permute.xlu0 %425
        %427 = vrot.lane.b32.xlu0 %v405, 127
        %v428 = vpop.permute.xlu0 %427
        %429 = vrot.lane.b32.xlu0 %v406, 127
        %v430 = vpop.permute.xlu0 %429
        %v439 = vadd.f32 %v391, %v416
        %v440 = vadd.f32 %v392, %v418
        %v441 = vadd.f32 %v393, %v420
        %v442 = vadd.f32 %v394, %v422
        %v443 = vadd.f32 %v395, %v424
        %v444 = vadd.f32 %v396, %v426
        %v445 = vadd.f32 %v397, %v428
        %v446 = vadd.f32 %v398, %v430
        %v447 = vmul.f32 %v356, 0.27406862
        %v448 = vmul.f32 %v379, 0.27406862
        %v449 = vmul.f32 %v363, 0.27406862
        %v450 = vmul.f32 %v380, 0.27406862
        %v451 = vmul.f32 %v371, 0.27406862
        %v452 = vmul.f32 %v381, 0.27406862
        %v453 = vmul.f32 %v378, 0.27406862
        %v454 = vmul.f32 %v382, 0.27406862
        %vm471 = vcmask 1046528
        %v472 = vrot.slane %v383, 1
        %v473 = vrot.slane %v447, 1
        %v474 = vsel %vm471, %v472, %v473
        %v475 = vrot.slane %v384, 1
        %v476 = vrot.slane %v448, 1
        %v477 = vsel %vm471, %v475, %v476
        %v478 = vrot.slane %v385, 1
        %v479 = vrot.slane %v449, 1
        %v480 = vsel %vm471, %v478, %v479
        %v481 = vrot.slane %v386, 1
        %v482 = vrot.slane %v450, 1
        %v483 = vsel %vm471, %v481, %v482
        %v484 = vrot.slane %v387, 1
        %v485 = vrot.slane %v451, 1
        %v486 = vsel %vm471, %v484, %v485
        %v487 = vrot.slane %v388, 1
        %v488 = vrot.slane %v452, 1
        %v489 = vsel %vm471, %v487, %v488
        %v490 = vrot.slane %v389, 1
        %v491 = vrot.slane %v453, 1
        %v492 = vsel %vm471, %v490, %v491
        %v493 = vrot.slane %v390, 1
        %v494 = vrot.slane %v454, 1
        %v495 = vsel %vm471, %v493, %v494
        %v504 = vadd.f32 %v439, %v474
        %v505 = vadd.f32 %v440, %v477
        %v506 = vadd.f32 %v441, %v480
        %v507 = vadd.f32 %v442, %v483
        %v508 = vadd.f32 %v443, %v486
        %v509 = vadd.f32 %v444, %v489
        %v510 = vadd.f32 %v445, %v492
        %v511 = vadd.f32 %v446, %v495
        %520 = vset.pattern.permute.xlu0 0
        %521 = vperm.xlu0 %520, %v504
        %v522 = vpop.permute.xlu0 %521
        %523 = vset.pattern.permute.xlu0 0
        %524 = vperm.xlu0 %523, %v505
        %v525 = vpop.permute.xlu0 %524
        %526 = vset.pattern.permute.xlu0 0
        %527 = vperm.xlu0 %526, %v506
        %v528 = vpop.permute.xlu0 %527
        %529 = vset.pattern.permute.xlu0 0
        %530 = vperm.xlu0 %529, %v507
        %v531 = vpop.permute.xlu0 %530
        %532 = vset.pattern.permute.xlu0 0
        %533 = vperm.xlu0 %532, %v508
        %v534 = vpop.permute.xlu0 %533
        %535 = vset.pattern.permute.xlu0 0
        %536 = vperm.xlu0 %535, %v509
        %v537 = vpop.permute.xlu0 %536
        %538 = vset.pattern.permute.xlu0 0
        %539 = vperm.xlu0 %538, %v510
        %v540 = vpop.permute.xlu0 %539
        %541 = vset.pattern.permute.xlu0 0
        %542 = vperm.xlu0 %541, %v511
        %v543 = vpop.permute.xlu0 %542
        %v544 = vlaneseq
        %v545 = vand.u32 %v544, 127
        %v546 = vlaneseq
        %v547 = vshrl.u32 %v546, 7
        %v548 = vsub.s32 %v545, %v547
        %v549 = vrot.slane %v522, %v548
        %v550 = vlaneseq
        %v551 = vshrl.u32 %v550, 7
        %v552 = vsub.s32 %v545, %v551
        %v553 = vrot.slane %v525, %v552
        %v554 = vlaneseq
        %v555 = vshrl.u32 %v554, 7
        %v556 = vsub.s32 %v545, %v555
        %v557 = vrot.slane %v528, %v556
        %v558 = vlaneseq
        %v559 = vshrl.u32 %v558, 7
        %v560 = vsub.s32 %v545, %v559
        %v561 = vrot.slane %v531, %v560
        %v562 = vlaneseq
        %v563 = vshrl.u32 %v562, 7
        %v564 = vsub.s32 %v545, %v563
        %v565 = vrot.slane %v534, %v564
        %v566 = vlaneseq
        %v567 = vshrl.u32 %v566, 7
        %v568 = vsub.s32 %v545, %v567
        %v569 = vrot.slane %v537, %v568
        %v570 = vlaneseq
        %v571 = vshrl.u32 %v570, 7
        %v572 = vsub.s32 %v545, %v571
        %v573 = vrot.slane %v540, %v572
        %v574 = vlaneseq
        %v575 = vshrl.u32 %v574, 7
        %v576 = vsub.s32 %v545, %v575
        %v577 = vrot.slane %v543, %v576
        %vm578 = vcmask 1041409
        %v579 = vsel %vm578, %v553, %v549
        %vm580 = vcmask 1042434
        %v581 = vsel %vm580, %v557, %v579
        %vm582 = vcmask 1043459
        %v583 = vsel %vm582, %v561, %v581
        %vm584 = vcmask 1044484
        %v585 = vsel %vm584, %v565, %v583
        %vm586 = vcmask 1045509
        %v587 = vsel %vm586, %v569, %v585
        %vm588 = vcmask 1046534
        %v589 = vsel %vm588, %v573, %v587
        %vm590 = vcmask 1047559
        %v591 = vsel %vm590, %v577, %v589
        %vm593 = vcmask 64512
        %594 = vst.msk [vmem:[%s134] sm:$0xff] %vm593, %v591
        %s595 = sand.u32 %s52, 1
        %s596 = scalar_lea.sflag [#allocation5], %s595
        %s597 = sand.u32 %s52, 1
        %s598 = smul.addr %s597, 8
        %s599 = scalar_lea.vmem [#allocation6], %s598
        // Predicated region
        $region29: #{tpu_custom_call.1} parent=23 // pred_check
          %p600 = pneg %p62
        $region30: #{tpu_custom_call.1} parent=23 // pred_check_branch
          %602 = sbr.rel (%p600) target = $region32
        $region31: #{tpu_custom_call.1} parent=23 // pred_region
          %s604 = ssub.s32 128, 128
          %605 = vsyncadd %s596, %s604
          %s606 = smul.addr %s18, 128
          %s607 = scalar_lea.hbm %s1, %s606
          %s609 = sshll.u32 %s599, 4
          %s610 = int_to_ptr.vmem [resolvable:$true] %s609
          %612 = dma.vmem_to_hbm [thread:$0]  %s610, 128, %s607, %s596
        $region32: #{tpu_custom_call.1} parent=23 // pred_fallthru
          _
      $region24: #{tpu_custom_call.1} parent=5 // pred_fallthru
        _
      %p613 = scmp.le.s32.totalorder 2, %s13
      // Predicated region
      $region33: #{tpu_custom_call.1} parent=5 // pred_check
        %p614 = pneg %p613
      $region34: #{tpu_custom_call.1} parent=5 // pred_check_branch
        %616 = sbr.rel (%p614) target = $region36
      $region35: #{tpu_custom_call.1} parent=5 // pred_region
        %s617 = ssub.s32 %s13, 2
        // Predicated region
        $region37: #{tpu_custom_call.1} parent=35 // pred_check
          %p618 = pneg %p68
        $region38: #{tpu_custom_call.1} parent=35 // pred_check_branch
          %620 = sbr.rel (%p618) target = $region40
        $region39: #{tpu_custom_call.1} parent=35 // pred_region
          %s621 = sand.u32 %s53, 1
          %s622 = scalar_lea.sflag [#allocation5], %s621
          %s623 = sand.u32 %s53, 1
          %s624 = smul.addr %s623, 8
          %s625 = scalar_lea.vmem [#allocation6], %s624
          %626 = dma.done %s622, 128
        $region40: #{tpu_custom_call.1} parent=35 // pred_fallthru
          _
      $region36: #{tpu_custom_call.1} parent=5 // pred_fallthru
        _
    $region6: #{tpu_custom_call.1} parent=1 // loop_footer
      %s17 = sadd.s32 1, %s13
    $region7: #{tpu_custom_call.1} parent=1 // loop_footer_branch
      %12 = sbr.rel target = $region3
    $region8: #{tpu_custom_call.1} parent=1 // loop_exit
      _
    %627 = vsyncpa [#allocation4], 1
    %s628 = scalar_lea.sflag [#allocation4], 1
    %629 = vsyncpa %s628, 1
    %630 = vsyncpa [#allocation5], 1
    %s631 = scalar_lea.sflag [#allocation5], 1
    %632 = vsyncpa %s631, 1

</llo_original>
